<compile_context>
chip_gen: v6e
topology: v6e:2x2x1
jax: 0.10.0
libtpu: 0.0.40
codegen_flags: <defaults>
</compile_context>

<pallas_src>
import functools

import jax
import jax.numpy as jnp
from jax.experimental import pallas as pl
from jax.experimental.pallas import tpu as pltpu


@functools.lru_cache(maxsize=None)
def _roll_matches_jnp_roll() -> bool:
    """One-time micro-probe: does pltpu.roll(x, 1, axis) == jnp.roll(x, 1, axis)?

    The pair-swap below selects between the two opposite lane-rolls by lane
    parity, so the select order must match the hardware roll direction.  This
    tiny 8x128 probe pins the convention down once per process instead of
    assuming it.
    """
    def probe_kernel(x_ref, o_ref):
        o_ref[...] = pltpu.roll(x_ref[...], 1, axis=1)

    x = jax.lax.broadcasted_iota(jnp.float32, (8, 128), 1)
    y = pl.pallas_call(
        probe_kernel, out_shape=jax.ShapeDtypeStruct((8, 128), jnp.float32)
    )(x)
    # jnp.roll semantics: out[j] = x[j - 1]  =>  out[0, 1] == 0.
    return bool(y[0, 1] == 0.0)


def _rope_kernel(x_ref, cos_ref, sin_ref, o_ref, *, roll_like_jnp: bool):
    # x_ref / o_ref: (Tt, H*D) block in the natural interleaved head layout.
    # cos_ref / sin_ref: (Tt, H*D) f32; sin already carries the per-lane sign.
    x = x_ref[...].astype(jnp.float32)
    n = x.shape[-1]

    # Swap adjacent lanes within each (even, odd) pair:
    #   x_swap[2i] = x[2i+1],  x_swap[2i+1] = x[2i]
    # (wrapped lanes are never selected because n is even)
    r_a = pltpu.roll(x, 1, axis=1)
    r_b = pltpu.roll(x, n - 1, axis=1)
    if roll_like_jnp:
        x_prev, x_next = r_a, r_b          # r_a[j] = x[j-1], r_b[j] = x[j+1]
    else:
        x_prev, x_next = r_b, r_a
    lane = jax.lax.broadcasted_iota(jnp.int32, x.shape, 1)
    x_swap = jnp.where(lane % 2 == 0, x_next, x_prev)

    # out[2i]   = x[2i]*cos_i - x[2i+1]*sin_i
    # out[2i+1] = x[2i]*sin_i + x[2i+1]*cos_i
    o_ref[...] = (x * cos_ref[...] + x_swap * sin_ref[...]).astype(o_ref.dtype)


def _pick_seq_tile(T: int, row_bytes: int, min_mult: int,
                   target_bytes: int = 1 << 20) -> int:
    """Largest multiple-of-`min_mult` divisor of T whose block stays <= ~1 MiB."""
    if T % min_mult != 0:
        return T  # full extent is always a legal block shape
    best = min_mult
    for tt in range(min_mult, T + 1, min_mult):
        if T % tt == 0 and tt * row_bytes <= target_bytes:
            best = tt
    return best


def rope_pallas(x: jax.Array, theta: float = 10000.0) -> jax.Array:
    """Apply RoPE to x of shape [B, T, H, D] (interleaved even/odd pairing)."""
    B, T, H, D = x.shape
    assert D % 2 == 0, "head_dim must be divisible by 2"
    HD = H * D

    # --- cos/sin cache, built directly in the interleaved [T, H*D] layout ----
    inv_freq = 1.0 / (theta ** (jnp.arange(0, D, 2, dtype=jnp.float32) / D))
    freqs = jnp.outer(jnp.arange(T, dtype=jnp.float32), inv_freq)      # [T, D/2]
    cos_d = jnp.repeat(jnp.cos(freqs), 2, axis=-1)                     # [T, D]
    sign = jnp.tile(jnp.array([-1.0, 1.0], jnp.float32), (D // 2,))    # -,+,-,+,...
    sin_d = jnp.repeat(jnp.sin(freqs), 2, axis=-1) * sign              # [T, D]
    cos_hd = jnp.tile(cos_d, (1, H))                                   # [T, H*D] f32
    sin_hd = jnp.tile(sin_d, (1, H))                                   # [T, H*D] f32

    # Free reshape (last two dims are contiguous): heads fold onto the lane axis.
    x2d = x.reshape(B, T, HD)

    itemsize = jnp.dtype(x.dtype).itemsize
    min_mult = 8 if itemsize >= 4 else (16 if itemsize == 2 else 32)
    Tt = _pick_seq_tile(T, HD * 4, min_mult)     # f32 row bytes (worst case)
    nT = T // Tt

    # Grid step i covers seq-tile t = i // B of batch b = i % B, so the cos/sin
    # block index changes only every B steps -> stays resident in VMEM.
    x_index = lambda i: (i % B, i // B, 0)
    cs_index = lambda i: (i // B, 0)
    x_spec = pl.BlockSpec((pl.Squeezed(), Tt, HD), x_index)
    o_spec = pl.BlockSpec((pl.Squeezed(), Tt, HD), x_index)
    cs_spec = pl.BlockSpec((Tt, HD), cs_index)

    # VMEM budget: in + out double-buffered at x dtype, cos + sin double-
    # buffered at f32, plus headroom.  Capped well below v7x's 64 MiB.
    block_in = Tt * HD * itemsize
    block_f32 = Tt * HD * 4
    vmem_limit = int(min(max(4 * block_in + 4 * block_f32 + (8 << 20), 16 << 20),
                         48 << 20))

    kernel = functools.partial(_rope_kernel,
                               roll_like_jnp=_roll_matches_jnp_roll())

    out2d = pl.pallas_call(
        kernel,
        out_shape=jax.ShapeDtypeStruct((B, T, HD), x.dtype),
        grid_spec=pltpu.PrefetchScalarGridSpec(
            num_scalar_prefetch=0,
            grid=(nT * B,),
            in_specs=[x_spec, cs_spec, cs_spec],
            out_specs=o_spec,
        ),
        compiler_params=pltpu.CompilerParams(
            dimension_semantics=("parallel",),
            vmem_limit_bytes=vmem_limit,
        ),
        # TODO(synk): pass input_output_aliases={0: 0} when the caller can donate
        # x (in-place Q/K rotation in the attention path); correctness-neutral.
    )(x2d, cos_hd, sin_hd)

    return out2d.reshape(B, T, H, D)


def rope_reference(x: jax.Array, theta: float = 10000.0) -> jax.Array:
    """Pure-JAX reference matching the PyTorch module semantics."""
    B, T, H, D = x.shape
    inv_freq = 1.0 / (theta ** (jnp.arange(0, D, 2, dtype=jnp.float32) / D))
    freqs = jnp.outer(jnp.arange(T, dtype=jnp.float32), inv_freq)
    cos = jnp.cos(freqs)[None, :, None, :]
    sin = jnp.sin(freqs)[None, :, None, :]
    xf = x.astype(jnp.float32)
    x1 = xf[..., 0::2]
    x2 = xf[..., 1::2]
    r1 = x1 * cos - x2 * sin
    r2 = x1 * sin + x2 * cos
    return jnp.stack([r1, r2], axis=-1).reshape(B, T, H, D).astype(x.dtype)


if __name__ == "__main__":
    key = jax.random.PRNGKey(0)
    B, T, H, D = 2, 8, 4, 32         # [batch, seq, num_heads, head_dim]
    theta = 10000.0
    x = jax.random.normal(key, (B, T, H, D), dtype=jnp.float32)

    out = rope_pallas(x, theta=theta)
    out = jax.block_until_ready(out)

    ref = rope_reference(x, theta=theta)
    assert out.shape == x.shape and out.dtype == x.dtype
    assert jnp.allclose(out, ref, atol=1e-5, rtol=1e-5)

    print("KERNEL_OK")
</pallas_src>

<mosaic_0001>
module attributes {stable_mosaic.version = 11 : i64} {
  func.func @probe_kernel(%arg0: memref<8x128xf32, #tpu.memory_space<vmem>>, %arg1: memref<8x128xf32, #tpu.memory_space<vmem>>) attributes {dimension_semantics = [], scalar_prefetch = 0 : i64, scratch_operands = 0 : i64, tpu.core_type = #tpu.core_type<tc>} {
    %c0 = arith.constant 0 : index
    %c0_0 = arith.constant 0 : index
    %0 = vector.load %arg0[%c0, %c0_0] : memref<8x128xf32, #tpu.memory_space<vmem>>, vector<8x128xf32>
    %c1_i32 = arith.constant 1 : i32
    %1 = tpu.dynamic_rotate %0 by %c1_i32 dim 1 : vector<8x128xf32>, i32 -> vector<8x128xf32>
    %c0_1 = arith.constant 0 : index
    %c0_2 = arith.constant 0 : index
    %2 = vector.load %arg1[%c0_1, %c0_2] : memref<8x128xf32, #tpu.memory_space<vmem>>, vector<8x128xf32>
    tpu.vector_store %arg1[%c0_1, %c0_2], %1 {strides = array<i32>} : memref<8x128xf32, #tpu.memory_space<vmem>>, vector<8x128xf32>,
    return
  }
}

</mosaic_0001>

<llo_original>
// kernel: tpu_custom_call.1
$region0: #{tpu_custom_call.1}
  #allocation0 [shape = 'u32[]', space=smem, size = 0x4, offset = 0x4, fixed_abs, tag = 'smem constant byte address 0x4 - core index']
  #allocation1 [shape = 'u32[144,128]{1,0:T(1,128)}', space=vmem, size = 0x12000, scoped, tag = 'internal scratch']
  %s0 = inlined_call_operand.hbm [shape: f32[8,128], index: 0, kind: input, shape index: {}]
  %s1 = inlined_call_operand.hbm [shape: f32[8,128], index: 1, kind: output, shape index: {}]
  %s2 = sld [smem:[#allocation0]]
  $region18: #{tpu_custom_call.1} parent=0
    _
  %s4 = ssub.s32 1, %s2
  %s5 = scalar_select 0, %s4, %s2
  $region1: #{tpu_custom_call.1} parent=0
    #allocation2 [shape = 'u8[4096]{0}', space=vmem, size = 0x1000, scoped, tag = 'input window, operand 0, single buffered']
    #allocation3 [shape = 's32[1]{0}', space=sflag, size = 0x4, scoped, tag = 'scoped memory for tpu_custom_call.1']
    #allocation4 [shape = 's32[1]{0}', space=sflag, size = 0x4, scoped, tag = 'scoped memory for tpu_custom_call.1']
    #allocation5 [shape = 'u8[4096]{0}', space=vmem, size = 0x1000, scoped, tag = 'output window, operand 0, single buffered']
    %6 = vsyncpa [#allocation3], 0
    %7 = vsyncpa [#allocation4], 0
    // Predicated region
    $region2: #{tpu_custom_call.1} parent=1 // pred_check
      _
    $region3: #{tpu_custom_call.1} parent=1 // pred_check_branch
      %9 = sbr.rel (0) target = $region5
    $region4: #{tpu_custom_call.1} parent=1 // pred_region
      %s11 = ssub.s32 128, 128
      %12 = vsyncadd [#allocation3], %s11
      %s14 = sshll.u32 [#allocation2], 4
      %s15 = int_to_ptr.vmem [resolvable:$true] %s14
      %17 = dma.hbm_to_vmem [thread:$0]  %s0, 128, %s15, [#allocation3]
    $region5: #{tpu_custom_call.1} parent=1 // pred_fallthru
      _
    // Predicated region
    $region6: #{tpu_custom_call.1} parent=1 // pred_check
      _
    $region7: #{tpu_custom_call.1} parent=1 // pred_check_branch
      %19 = sbr.rel (0) target = $region9
    $region8: #{tpu_custom_call.1} parent=1 // pred_region
      %20 = dma.done [#allocation3], 128
    $region9: #{tpu_custom_call.1} parent=1 // pred_fallthru
      _
    %v21 = vld [vmem:[#allocation2] sm:$0xff]
    %22 = vrot.lane.b32.xlu0 %v21, 1
    %v23 = vpop.permute.xlu0 %22
    %24 = vst [vmem:[#allocation5] sm:$0xff] %v23
    // Predicated region
    $region10: #{tpu_custom_call.1} parent=1 // pred_check
      _
    $region11: #{tpu_custom_call.1} parent=1 // pred_check_branch
      %26 = sbr.rel (0) target = $region13
    $region12: #{tpu_custom_call.1} parent=1 // pred_region
      %s28 = ssub.s32 128, 128
      %29 = vsyncadd [#allocation4], %s28
      %s31 = sshll.u32 [#allocation5], 4
      %s32 = int_to_ptr.vmem [resolvable:$true] %s31
      %34 = dma.vmem_to_hbm [thread:$0]  %s32, 128, %s1, [#allocation4]
    $region13: #{tpu_custom_call.1} parent=1 // pred_fallthru
      _
    // Predicated region
    $region14: #{tpu_custom_call.1} parent=1 // pred_check
      _
    $region15: #{tpu_custom_call.1} parent=1 // pred_check_branch
      %36 = sbr.rel (0) target = $region17
    $region16: #{tpu_custom_call.1} parent=1 // pred_region
      %37 = dma.done [#allocation4], 128
    $region17: #{tpu_custom_call.1} parent=1 // pred_fallthru
      _
    %38 = vsyncpa [#allocation3], 1
    %39 = vsyncpa [#allocation4], 1

</llo_original>
